<compile_context>
chip_gen: v5e
topology: v5e:2x2
jax: 0.10.0
libtpu: 0.0.40
codegen_flags: <defaults>
</compile_context>

<pallas_src>
import math

import jax
import jax.numpy as jnp
from jax.experimental import pallas as pl
from jax.experimental.pallas import tpu as pltpu


# ----------------------------------------------------------------------------
# In-kernel building blocks
# ----------------------------------------------------------------------------
def _layernorm(x, g, b, eps=1e-5):
    mu = jnp.mean(x, axis=-1, keepdims=True)
    var = jnp.mean((x - mu) ** 2, axis=-1, keepdims=True)
    return (x - mu) * jax.lax.rsqrt(var + eps) * g + b


def _encode_selected(x_ref, xsel_ref, bias_ref, w_refs):
    """One post-LN encoder layer evaluated only for the B selected query rows.

    x_ref    : [B*S, D] bf16  all-token embeddings (needed for K/V only)
    xsel_ref : [B, D]   f32   embeddings of the selected (masked) positions
    bias_ref : [B, B*S] f32   block-diagonal additive attention-mask bias
    returns  : [B, D]   f32   final hidden state of the selected rows
    """
    (wq_ref, bq_ref, wk_ref, bk_ref, wv_ref, bv_ref, wo_ref, bo_ref,
     g1_ref, be1_ref, w1_ref, c1_ref, w2_ref, c2_ref, g2_ref, be2_ref) = w_refs
    f32, bf16 = jnp.float32, jnp.bfloat16

    xf = x_ref[...]                                  # [B*S, D] bf16
    xsel = xsel_ref[...]                             # [B, D]  f32
    D = xsel.shape[-1]
    scale = 1.0 / math.sqrt(float(D))

    # K / V projections: the only ops that still need all S rows.
    kf = jnp.dot(xf, wk_ref[...], preferred_element_type=f32) + bk_ref[...]
    vf = jnp.dot(xf, wv_ref[...], preferred_element_type=f32) + bv_ref[...]

    # Q only for the selected rows.
    qsel = (jnp.dot(xsel.astype(bf16), wq_ref[...], preferred_element_type=f32)
            + bq_ref[...])                           # [B, D] f32

    # Batched single-row attention: one NT matmul over the flattened keys.
    # bias_ref is -1e9 for cross-batch keys and masked positions, so the
    # softmax reduces to the correct per-batch attention.
    s = jax.lax.dot_general(qsel.astype(bf16), kf.astype(bf16),
                            (((1,), (1,)), ((), ())),
                            preferred_element_type=f32) * scale   # [B, B*S]
    s = s + bias_ref[...]
    s = s - jnp.max(s, axis=-1, keepdims=True)
    p = jnp.exp(s)
    p = p * pl.reciprocal(jnp.sum(p, axis=-1, keepdims=True), approx=True)
    attn = jnp.dot(p.astype(bf16), vf.astype(bf16),
                   preferred_element_type=f32)                     # [B, D]

    attn = (jnp.dot(attn.astype(bf16), wo_ref[...], preferred_element_type=f32)
            + bo_ref[...])
    h1 = _layernorm(xsel + attn, g1_ref[...], be1_ref[...])       # [B, D] f32

    f = (jnp.dot(h1.astype(bf16), w1_ref[...], preferred_element_type=f32)
         + c1_ref[...])
    f = jax.nn.gelu(f, approximate=True)
    f = (jnp.dot(f.astype(bf16), w2_ref[...], preferred_element_type=f32)
         + c2_ref[...])
    return _layernorm(h1 + f, g2_ref[...], be2_ref[...])          # [B, D] f32


# ----------------------------------------------------------------------------
# Kernels
# ----------------------------------------------------------------------------
def masked_logit_kernel(*refs):
    """normalize=False: no [B, V] projection at all — only the tk columns."""
    (x_ref, xsel_ref, bias_ref, *w_refs, wsel_ref, bsel_ref, out_ref) = refs
    hsel = _encode_selected(x_ref, xsel_ref, bias_ref, tuple(w_refs))
    out_ref[...] = (jnp.sum(hsel * wsel_ref[...], axis=-1, keepdims=True)
                    + bsel_ref[...])                               # [B, 1]


def masked_logit_norm_kernel(*refs):
    """normalize=True: stream wout over V tiles; accumulate ||out_index||_F^2."""
    (x_ref, xsel_ref, bias_ref, *w_refs, wsel_ref, bsel_ref,
     wout_ref, bout_ref, out_ref, hsel_scr, tok_scr, ssq_scr) = refs
    j = pl.program_id(0)

    @pl.when(j == 0)
    def _():
        hsel = _encode_selected(x_ref, xsel_ref, bias_ref, tuple(w_refs))
        hsel_scr[...] = hsel
        tok_scr[...] = (jnp.sum(hsel * wsel_ref[...], axis=-1, keepdims=True)
                        + bsel_ref[...])
        ssq_scr[...] = jnp.zeros_like(ssq_scr)

    # Per-tile projection of only the B selected rows: [B, D] x [D, TN].
    tile = (jnp.dot(hsel_scr[...].astype(jnp.bfloat16), wout_ref[...],
                    preferred_element_type=jnp.float32) + bout_ref[...])
    ssq_scr[...] += jnp.sum(tile * tile, keepdims=True)            # [1, 1]

    @pl.when(j == pl.num_programs(0) - 1)
    def _():
        out_ref[...] = tok_scr[...] * jax.lax.rsqrt(ssq_scr[...])


# ----------------------------------------------------------------------------
# Wrapper
# ----------------------------------------------------------------------------
def masked_logit_forward(index, tk, input_ids, attention_mask, params,
                         normalize=False, v_tile=128):
    """Pallas implementation of MaskedLogit.forward."""
    B, S = input_ids.shape
    D = params["wq"].shape[0]
    V = params["wout"].shape[1]
    f32, bf16 = jnp.float32, jnp.bfloat16
    if attention_mask is None:
        attention_mask = jnp.ones((B, S), dtype=jnp.int32)

    # ---- JAX glue: gathers are pure addressing ------------------------------
    x = (params["tok_emb"][input_ids] + params["pos_emb"][None, :S, :]).astype(f32)
    xf = x.reshape(B * S, D).astype(bf16)                  # all rows (K/V)
    xsel = x[jnp.arange(B), index].astype(f32)             # [B, D] selected rows

    # Block-diagonal additive attention-mask bias over flattened keys [B, B*S].
    m = attention_mask.astype(f32)
    blockdiag = jnp.repeat(jnp.eye(B, dtype=f32), S, axis=1)       # [B, B*S]
    allow = blockdiag * m.reshape(1, B * S)
    bias = (1.0 - allow) * (-1e9)

    # Gather the tk columns of the LM head (the only columns the output needs).
    wsel = params["wout"].T[tk].astype(f32)                        # [B, D]
    bsel = params["bout"][0, tk].reshape(B, 1).astype(f32)         # [B, 1]

    wb = lambda name: params[name].astype(bf16)
    weight_args = (wb("wq"), params["bq"], wb("wk"), params["bk"],
                   wb("wv"), params["bv"], wb("wo"), params["bo"],
                   params["g1"], params["be1"], wb("w1"), params["c1"],
                   wb("w2"), params["c2"], params["g2"], params["be2"])

    vmem = pl.BlockSpec(memory_space=pltpu.MemorySpace.VMEM)

    if not normalize:
        out = pl.pallas_call(
            masked_logit_kernel,
            out_shape=jax.ShapeDtypeStruct((B, 1), f32),
            in_specs=[vmem] * (3 + len(weight_args) + 2),
            out_specs=vmem,
        )(xf, xsel, bias, *weight_args, wsel, bsel)
        return out.reshape(B)

    # normalize=True: grid over vocab tiles; wout is streamed, never resident.
    tn = v_tile if V % v_tile == 0 else V
    n_tiles = V // tn

    def full(shape):
        return pl.BlockSpec(shape, lambda j: (0,) * len(shape))

    in_specs = ([full((B * S, D)), full((B, D)), full((B, B * S))]
                + [full(w.shape) for w in weight_args]
                + [full((B, D)), full((B, 1)),
                   pl.BlockSpec((D, tn), lambda j: (0, j)),
                   pl.BlockSpec((1, tn), lambda j: (0, j))])

    out = pl.pallas_call(
        masked_logit_norm_kernel,
        out_shape=jax.ShapeDtypeStruct((B, 1), f32),
        grid=(n_tiles,),
        in_specs=in_specs,
        out_specs=pl.BlockSpec((B, 1), lambda j: (0, 0)),
        scratch_shapes=[pltpu.VMEM((B, D), f32),     # hsel
                        pltpu.VMEM((B, 1), f32),     # picked token logit
                        pltpu.VMEM((1, 1), f32)],    # sum of squares
        compiler_params=pltpu.CompilerParams(
            dimension_semantics=("arbitrary",)),
    )(xf, xsel, bias, *weight_args, wsel, bsel,
      params["wout"].astype(bf16), params["bout"])
    return out.reshape(B)


# ----------------------------------------------------------------------------
# Reference (pure JAX, f32) for a sanity check
# ----------------------------------------------------------------------------
def reference_forward(index, tk, input_ids, attention_mask, params,
                      normalize=False):
    B, S = input_ids.shape
    x = params["tok_emb"][input_ids] + params["pos_emb"][None, :S, :]
    m = attention_mask.astype(jnp.float32)

    def ln(x, g, b, eps=1e-5):
        mu = jnp.mean(x, -1, keepdims=True)
        var = jnp.mean((x - mu) ** 2, -1, keepdims=True)
        return (x - mu) * jax.lax.rsqrt(var + eps) * g + b

    q = x @ params["wq"] + params["bq"]
    k = x @ params["wk"] + params["bk"]
    v = x @ params["wv"] + params["bv"]
    scores = jnp.einsum("bqd,bkd->bqk", q, k) / jnp.sqrt(jnp.float32(x.shape[-1]))
    scores = scores + (1.0 - m)[:, None, :] * (-1e9)
    p = jax.nn.softmax(scores, axis=-1)
    attn = jnp.einsum("bqk,bkd->bqd", p, v) @ params["wo"] + params["bo"]
    h = ln(x + attn, params["g1"], params["be1"])
    f = jax.nn.gelu(h @ params["w1"] + params["c1"], approximate=True)
    f = f @ params["w2"] + params["c2"]
    y = ln(h + f, params["g2"], params["be2"])
    logits = y @ params["wout"] + params["bout"]
    out_index = logits[jnp.arange(B), index]   # [B, V]
    out_token = out_index[jnp.arange(B), tk]   # [B]
    if normalize:
        out_token = out_token / jnp.linalg.norm(out_index)
    return out_token


# ----------------------------------------------------------------------------
# Deterministic parameter init
# ----------------------------------------------------------------------------
def init_params(key, V, S, D, F):
    ks = jax.random.split(key, 9)

    def w(k, shape):
        return (0.02 * jax.random.normal(k, shape)).astype(jnp.float32)

    zeros = lambda shape: jnp.zeros(shape, jnp.float32)
    ones = lambda shape: jnp.ones(shape, jnp.float32)
    return dict(
        tok_emb=w(ks[0], (V, D)),
        pos_emb=w(ks[1], (S, D)),
        wq=w(ks[2], (D, D)), bq=zeros((1, D)),
        wk=w(ks[3], (D, D)), bk=zeros((1, D)),
        wv=w(ks[4], (D, D)), bv=zeros((1, D)),
        wo=w(ks[5], (D, D)), bo=zeros((1, D)),
        g1=ones((1, D)), be1=zeros((1, D)),
        w1=w(ks[6], (D, F)), c1=zeros((1, F)),
        w2=w(ks[7], (F, D)), c2=zeros((1, D)),
        g2=ones((1, D)), be2=zeros((1, D)),
        wout=w(ks[8], (D, V)), bout=zeros((1, V)),
    )


if __name__ == "__main__":
    # Lane-aligned toy shapes (D, F, V multiples of 128; S a multiple of 8).
    B, S, D, V, F = 2, 8, 128, 256, 256

    params = init_params(jax.random.PRNGKey(0), V, S, D, F)

    kin = jax.random.split(jax.random.PRNGKey(0), 2)
    input_ids = jax.random.randint(kin[0], (B, S), 0, V, dtype=jnp.int32)
    attention_mask = jnp.ones((B, S), dtype=jnp.int32).at[1, S - 1].set(0)
    index = jnp.array([3, 5], dtype=jnp.int32)    # masked position per batch
    tk = jnp.array([10, 42], dtype=jnp.int32)     # target token id per batch

    for normalize in (False, True):
        out = masked_logit_forward(index, tk, input_ids, attention_mask,
                                   params, normalize=normalize)
        out = jax.block_until_ready(out)
        ref = reference_forward(index, tk, input_ids, attention_mask,
                                params, normalize=normalize)
        assert out.shape == (B,)
        assert jnp.allclose(out, ref, atol=5e-2, rtol=5e-2), (out, ref)

    print("KERNEL_OK")
</pallas_src>

<mosaic_0001>
module attributes {stable_mosaic.version = 11 : i64} {
  func.func @masked_logit_kernel(%arg0: memref<16x128xbf16, #tpu.memory_space<vmem>>, %arg1: memref<2x128xf32, #tpu.memory_space<vmem>>, %arg2: memref<2x16xf32, #tpu.memory_space<vmem>>, %arg3: memref<128x128xbf16, #tpu.memory_space<vmem>>, %arg4: memref<1x128xf32, #tpu.memory_space<vmem>>, %arg5: memref<128x128xbf16, #tpu.memory_space<vmem>>, %arg6: memref<1x128xf32, #tpu.memory_space<vmem>>, %arg7: memref<128x128xbf16, #tpu.memory_space<vmem>>, %arg8: memref<1x128xf32, #tpu.memory_space<vmem>>, %arg9: memref<128x128xbf16, #tpu.memory_space<vmem>>, %arg10: memref<1x128xf32, #tpu.memory_space<vmem>>, %arg11: memref<1x128xf32, #tpu.memory_space<vmem>>, %arg12: memref<1x128xf32, #tpu.memory_space<vmem>>, %arg13: memref<128x256xbf16, #tpu.memory_space<vmem>>, %arg14: memref<1x256xf32, #tpu.memory_space<vmem>>, %arg15: memref<256x128xbf16, #tpu.memory_space<vmem>>, %arg16: memref<1x128xf32, #tpu.memory_space<vmem>>, %arg17: memref<1x128xf32, #tpu.memory_space<vmem>>, %arg18: memref<1x128xf32, #tpu.memory_space<vmem>>, %arg19: memref<2x128xf32, #tpu.memory_space<vmem>>, %arg20: memref<2x1xf32, #tpu.memory_space<vmem>>, %arg21: memref<2x1xf32, #tpu.memory_space<vmem>>) attributes {dimension_semantics = [], scalar_prefetch = 0 : i64, scratch_operands = 0 : i64, tpu.core_type = #tpu.core_type<tc>} {
    %c0 = arith.constant 0 : index
    %c0_0 = arith.constant 0 : index
    %0 = vector.load %arg0[%c0, %c0_0] : memref<16x128xbf16, #tpu.memory_space<vmem>>, vector<16x128xbf16>
    %c0_1 = arith.constant 0 : index
    %c0_2 = arith.constant 0 : index
    %1 = vector.load %arg1[%c0_1, %c0_2] : memref<2x128xf32, #tpu.memory_space<vmem>>, vector<2x128xf32>
    %c0_3 = arith.constant 0 : index
    %c0_4 = arith.constant 0 : index
    %2 = vector.load %arg5[%c0_3, %c0_4] : memref<128x128xbf16, #tpu.memory_space<vmem>>, vector<128x128xbf16>
    %cst = arith.constant dense<0.000000e+00> : vector<16x128xf32>
    %3 = tpu.matmul %0, %2, %cst {dimension_numbers = #tpu.dot_dimension_numbers<[1], [0], [0], [1], [0, 0, 1, 1], [], []>} : vector<16x128xbf16>, vector<128x128xbf16>, vector<16x128xf32> -> vector<16x128xf32>
    %c0_5 = arith.constant 0 : index
    %c0_6 = arith.constant 0 : index
    %4 = vector.load %arg6[%c0_5, %c0_6] : memref<1x128xf32, #tpu.memory_space<vmem>>, vector<1x128xf32>
    %5 = vector.broadcast %4 : vector<1x128xf32> to vector<16x128xf32>
    %6 = arith.addf %3, %5 : vector<16x128xf32>
    %c0_7 = arith.constant 0 : index
    %c0_8 = arith.constant 0 : index
    %7 = vector.load %arg7[%c0_7, %c0_8] : memref<128x128xbf16, #tpu.memory_space<vmem>>, vector<128x128xbf16>
    %cst_9 = arith.constant dense<0.000000e+00> : vector<16x128xf32>
    %8 = tpu.matmul %0, %7, %cst_9 {dimension_numbers = #tpu.dot_dimension_numbers<[1], [0], [0], [1], [0, 0, 1, 1], [], []>} : vector<16x128xbf16>, vector<128x128xbf16>, vector<16x128xf32> -> vector<16x128xf32>
    %c0_10 = arith.constant 0 : index
    %c0_11 = arith.constant 0 : index
    %9 = vector.load %arg8[%c0_10, %c0_11] : memref<1x128xf32, #tpu.memory_space<vmem>>, vector<1x128xf32>
    %10 = vector.broadcast %9 : vector<1x128xf32> to vector<16x128xf32>
    %11 = arith.addf %8, %10 : vector<16x128xf32>
    %12 = arith.truncf %1 : vector<2x128xf32> to vector<2x128xbf16>
    %c0_12 = arith.constant 0 : index
    %c0_13 = arith.constant 0 : index
    %13 = vector.load %arg3[%c0_12, %c0_13] : memref<128x128xbf16, #tpu.memory_space<vmem>>, vector<128x128xbf16>
    %cst_14 = arith.constant dense<0.000000e+00> : vector<2x128xf32>
    %14 = tpu.matmul %12, %13, %cst_14 {dimension_numbers = #tpu.dot_dimension_numbers<[1], [0], [0], [1], [0, 0, 1, 1], [], []>} : vector<2x128xbf16>, vector<128x128xbf16>, vector<2x128xf32> -> vector<2x128xf32>
    %c0_15 = arith.constant 0 : index
    %c0_16 = arith.constant 0 : index
    %15 = vector.load %arg4[%c0_15, %c0_16] : memref<1x128xf32, #tpu.memory_space<vmem>>, vector<1x128xf32>
    %16 = vector.broadcast %15 : vector<1x128xf32> to vector<2x128xf32>
    %17 = arith.addf %14, %16 : vector<2x128xf32>
    %18 = arith.truncf %17 : vector<2x128xf32> to vector<2x128xbf16>
    %19 = arith.truncf %6 : vector<16x128xf32> to vector<16x128xbf16>
    %cst_17 = arith.constant dense<0.000000e+00> : vector<2x16xf32>
    %20 = tpu.matmul %18, %19, %cst_17 {dimension_numbers = #tpu.dot_dimension_numbers<[1], [1], [0], [0], [0, 0, 1, 0], [], []>} : vector<2x128xbf16>, vector<16x128xbf16>, vector<2x16xf32> -> vector<2x16xf32>
    %cst_18 = arith.constant 0.0883883461 : f32
    %21 = vector.broadcast %cst_18 : f32 to vector<2x16xf32>
    %22 = arith.mulf %20, %21 : vector<2x16xf32>
    %c0_19 = arith.constant 0 : index
    %c0_20 = arith.constant 0 : index
    %23 = vector.load %arg2[%c0_19, %c0_20] : memref<2x16xf32, #tpu.memory_space<vmem>>, vector<2x16xf32>
    %24 = arith.addf %22, %23 : vector<2x16xf32>
    %cst_21 = arith.constant dense<0xFF800000> : vector<2xf32>
    %25 = vector.multi_reduction <maximumf>, %24, %cst_21 [1] : vector<2x16xf32> to vector<2xf32>
    %26 = vector.shape_cast %25 : vector<2xf32> to vector<2x1xf32>
    %27 = vector.broadcast %26 : vector<2x1xf32> to vector<2x16xf32>
    %28 = arith.subf %24, %27 : vector<2x16xf32>
    %29 = math.exp %28 : vector<2x16xf32>
    %cst_22 = arith.constant dense<0.000000e+00> : vector<2xf32>
    %30 = vector.multi_reduction <add>, %29, %cst_22 [1] : vector<2x16xf32> to vector<2xf32>
    %31 = vector.shape_cast %30 : vector<2xf32> to vector<2x1xf32>
    %32 = tpu.reciprocal %31 {approx = true} : vector<2x1xf32> -> vector<2x1xf32>
    %33 = vector.broadcast %32 : vector<2x1xf32> to vector<2x16xf32>
    %34 = arith.mulf %29, %33 : vector<2x16xf32>
    %35 = arith.truncf %34 : vector<2x16xf32> to vector<2x16xbf16>
    %36 = arith.truncf %11 : vector<16x128xf32> to vector<16x128xbf16>
    %cst_23 = arith.constant dense<0.000000e+00> : vector<2x128xf32>
    %37 = tpu.matmul %35, %36, %cst_23 {dimension_numbers = #tpu.dot_dimension_numbers<[1], [0], [0], [1], [0, 0, 1, 1], [], []>} : vector<2x16xbf16>, vector<16x128xbf16>, vector<2x128xf32> -> vector<2x128xf32>
    %38 = arith.truncf %37 : vector<2x128xf32> to vector<2x128xbf16>
    %c0_24 = arith.constant 0 : index
    %c0_25 = arith.constant 0 : index
    %39 = vector.load %arg9[%c0_24, %c0_25] : memref<128x128xbf16, #tpu.memory_space<vmem>>, vector<128x128xbf16>
    %cst_26 = arith.constant dense<0.000000e+00> : vector<2x128xf32>
    %40 = tpu.matmul %38, %39, %cst_26 {dimension_numbers = #tpu.dot_dimension_numbers<[1], [0], [0], [1], [0, 0, 1, 1], [], []>} : vector<2x128xbf16>, vector<128x128xbf16>, vector<2x128xf32> -> vector<2x128xf32>
    %c0_27 = arith.constant 0 : index
    %c0_28 = arith.constant 0 : index
    %41 = vector.load %arg10[%c0_27, %c0_28] : memref<1x128xf32, #tpu.memory_space<vmem>>, vector<1x128xf32>
    %42 = vector.broadcast %41 : vector<1x128xf32> to vector<2x128xf32>
    %43 = arith.addf %40, %42 : vector<2x128xf32>
    %44 = arith.addf %1, %43 : vector<2x128xf32>
    %c0_29 = arith.constant 0 : index
    %c0_30 = arith.constant 0 : index
    %45 = vector.load %arg11[%c0_29, %c0_30] : memref<1x128xf32, #tpu.memory_space<vmem>>, vector<1x128xf32>
    %c0_31 = arith.constant 0 : index
    %c0_32 = arith.constant 0 : index
    %46 = vector.load %arg12[%c0_31, %c0_32] : memref<1x128xf32, #tpu.memory_space<vmem>>, vector<1x128xf32>
    %cst_33 = arith.constant dense<0.000000e+00> : vector<2xf32>
    %47 = vector.multi_reduction <add>, %44, %cst_33 [1] : vector<2x128xf32> to vector<2xf32>
    %48 = vector.shape_cast %47 : vector<2xf32> to vector<2x1xf32>
    %cst_34 = arith.constant 1.280000e+02 : f32
    %49 = vector.broadcast %cst_34 : f32 to vector<2x1xf32>
    %50 = arith.divf %48, %49 : vector<2x1xf32>
    %51 = vector.broadcast %50 : vector<2x1xf32> to vector<2x128xf32>
    %52 = arith.subf %44, %51 : vector<2x128xf32>
    %53 = arith.mulf %52, %52 : vector<2x128xf32>
    %cst_35 = arith.constant dense<0.000000e+00> : vector<2xf32>
    %54 = vector.multi_reduction <add>, %53, %cst_35 [1] : vector<2x128xf32> to vector<2xf32>
    %55 = vector.shape_cast %54 : vector<2xf32> to vector<2x1xf32>
    %cst_36 = arith.constant 1.280000e+02 : f32
    %56 = vector.broadcast %cst_36 : f32 to vector<2x1xf32>
    %57 = arith.divf %55, %56 : vector<2x1xf32>
    %58 = vector.broadcast %50 : vector<2x1xf32> to vector<2x128xf32>
    %59 = arith.subf %44, %58 : vector<2x128xf32>
    %cst_37 = arith.constant 9.99999974E-6 : f32
    %60 = vector.broadcast %cst_37 : f32 to vector<2x1xf32>
    %61 = arith.addf %57, %60 : vector<2x1xf32>
    %62 = math.rsqrt %61 : vector<2x1xf32>
    %63 = vector.broadcast %62 : vector<2x1xf32> to vector<2x128xf32>
    %64 = arith.mulf %59, %63 : vector<2x128xf32>
    %65 = vector.broadcast %45 : vector<1x128xf32> to vector<2x128xf32>
    %66 = arith.mulf %64, %65 : vector<2x128xf32>
    %67 = vector.broadcast %46 : vector<1x128xf32> to vector<2x128xf32>
    %68 = arith.addf %66, %67 : vector<2x128xf32>
    %69 = arith.truncf %68 : vector<2x128xf32> to vector<2x128xbf16>
    %c0_38 = arith.constant 0 : index
    %c0_39 = arith.constant 0 : index
    %70 = vector.load %arg13[%c0_38, %c0_39] : memref<128x256xbf16, #tpu.memory_space<vmem>>, vector<128x256xbf16>
    %cst_40 = arith.constant dense<0.000000e+00> : vector<2x256xf32>
    %71 = tpu.matmul %69, %70, %cst_40 {dimension_numbers = #tpu.dot_dimension_numbers<[1], [0], [0], [1], [0, 0, 1, 1], [], []>} : vector<2x128xbf16>, vector<128x256xbf16>, vector<2x256xf32> -> vector<2x256xf32>
    %c0_41 = arith.constant 0 : index
    %c0_42 = arith.constant 0 : index
    %72 = vector.load %arg14[%c0_41, %c0_42] : memref<1x256xf32, #tpu.memory_space<vmem>>, vector<1x256xf32>
    %73 = vector.broadcast %72 : vector<1x256xf32> to vector<2x256xf32>
    %74 = arith.addf %71, %73 : vector<2x256xf32>
    %75 = arith.mulf %74, %74 : vector<2x256xf32>
    %76 = arith.mulf %74, %75 : vector<2x256xf32>
    %cst_43 = arith.constant 4.471500e-02 : f32
    %77 = vector.broadcast %cst_43 : f32 to vector<2x256xf32>
    %78 = arith.mulf %77, %76 : vector<2x256xf32>
    %79 = arith.addf %74, %78 : vector<2x256xf32>
    %cst_44 = arith.constant 0.797884583 : f32
    %80 = vector.broadcast %cst_44 : f32 to vector<2x256xf32>
    %81 = arith.mulf %80, %79 : vector<2x256xf32>
    %82 = math.tanh %81 : vector<2x256xf32>
    %cst_45 = arith.constant 1.000000e+00 : f32
    %83 = vector.broadcast %cst_45 : f32 to vector<2x256xf32>
    %84 = arith.addf %83, %82 : vector<2x256xf32>
    %cst_46 = arith.constant 5.000000e-01 : f32
    %85 = vector.broadcast %cst_46 : f32 to vector<2x256xf32>
    %86 = arith.mulf %85, %84 : vector<2x256xf32>
    %87 = arith.mulf %74, %86 : vector<2x256xf32>
    %88 = arith.truncf %87 : vector<2x256xf32> to vector<2x256xbf16>
    %c0_47 = arith.constant 0 : index
    %c0_48 = arith.constant 0 : index
    %89 = vector.load %arg15[%c0_47, %c0_48] : memref<256x128xbf16, #tpu.memory_space<vmem>>, vector<256x128xbf16>
    %cst_49 = arith.constant dense<0.000000e+00> : vector<2x128xf32>
    %90 = tpu.matmul %88, %89, %cst_49 {dimension_numbers = #tpu.dot_dimension_numbers<[1], [0], [0], [1], [0, 0, 1, 1], [], []>} : vector<2x256xbf16>, vector<256x128xbf16>, vector<2x128xf32> -> vector<2x128xf32>
    %c0_50 = arith.constant 0 : index
    %c0_51 = arith.constant 0 : index
    %91 = vector.load %arg16[%c0_50, %c0_51] : memref<1x128xf32, #tpu.memory_space<vmem>>, vector<1x128xf32>
    %92 = vector.broadcast %91 : vector<1x128xf32> to vector<2x128xf32>
    %93 = arith.addf %90, %92 : vector<2x128xf32>
    %94 = arith.addf %68, %93 : vector<2x128xf32>
    %c0_52 = arith.constant 0 : index
    %c0_53 = arith.constant 0 : index
    %95 = vector.load %arg17[%c0_52, %c0_53] : memref<1x128xf32, #tpu.memory_space<vmem>>, vector<1x128xf32>
    %c0_54 = arith.constant 0 : index
    %c0_55 = arith.constant 0 : index
    %96 = vector.load %arg18[%c0_54, %c0_55] : memref<1x128xf32, #tpu.memory_space<vmem>>, vector<1x128xf32>
    %cst_56 = arith.constant dense<0.000000e+00> : vector<2xf32>
    %97 = vector.multi_reduction <add>, %94, %cst_56 [1] : vector<2x128xf32> to vector<2xf32>
    %98 = vector.shape_cast %97 : vector<2xf32> to vector<2x1xf32>
    %cst_57 = arith.constant 1.280000e+02 : f32
    %99 = vector.broadcast %cst_57 : f32 to vector<2x1xf32>
    %100 = arith.divf %98, %99 : vector<2x1xf32>
    %101 = vector.broadcast %100 : vector<2x1xf32> to vector<2x128xf32>
    %102 = arith.subf %94, %101 : vector<2x128xf32>
    %103 = arith.mulf %102, %102 : vector<2x128xf32>
    %cst_58 = arith.constant dense<0.000000e+00> : vector<2xf32>
    %104 = vector.multi_reduction <add>, %103, %cst_58 [1] : vector<2x128xf32> to vector<2xf32>
    %105 = vector.shape_cast %104 : vector<2xf32> to vector<2x1xf32>
    %cst_59 = arith.constant 1.280000e+02 : f32
    %106 = vector.broadcast %cst_59 : f32 to vector<2x1xf32>
    %107 = arith.divf %105, %106 : vector<2x1xf32>
    %108 = vector.broadcast %100 : vector<2x1xf32> to vector<2x128xf32>
    %109 = arith.subf %94, %108 : vector<2x128xf32>
    %cst_60 = arith.constant 9.99999974E-6 : f32
    %110 = vector.broadcast %cst_60 : f32 to vector<2x1xf32>
    %111 = arith.addf %107, %110 : vector<2x1xf32>
    %112 = math.rsqrt %111 : vector<2x1xf32>
    %113 = vector.broadcast %112 : vector<2x1xf32> to vector<2x128xf32>
    %114 = arith.mulf %109, %113 : vector<2x128xf32>
    %115 = vector.broadcast %95 : vector<1x128xf32> to vector<2x128xf32>
    %116 = arith.mulf %114, %115 : vector<2x128xf32>
    %117 = vector.broadcast %96 : vector<1x128xf32> to vector<2x128xf32>
    %118 = arith.addf %116, %117 : vector<2x128xf32>
    %c0_61 = arith.constant 0 : index
    %c0_62 = arith.constant 0 : index
    %119 = vector.load %arg19[%c0_61, %c0_62] : memref<2x128xf32, #tpu.memory_space<vmem>>, vector<2x128xf32>
    %120 = arith.mulf %118, %119 : vector<2x128xf32>
    %cst_63 = arith.constant dense<0.000000e+00> : vector<2xf32>
    %121 = vector.multi_reduction <add>, %120, %cst_63 [1] : vector<2x128xf32> to vector<2xf32>
    %122 = vector.shape_cast %121 : vector<2xf32> to vector<2x1xf32>
    %c0_64 = arith.constant 0 : index
    %c0_65 = arith.constant 0 : index
    %123 = vector.load %arg20[%c0_64, %c0_65] : memref<2x1xf32, #tpu.memory_space<vmem>>, vector<2x1xf32>
    %124 = arith.addf %122, %123 : vector<2x1xf32>
    %c0_66 = arith.constant 0 : index
    %c0_67 = arith.constant 0 : index
    %125 = vector.load %arg21[%c0_66, %c0_67] : memref<2x1xf32, #tpu.memory_space<vmem>>, vector<2x1xf32>
    tpu.vector_store %arg21[%c0_66, %c0_67], %124 {strides = array<i32>} : memref<2x1xf32, #tpu.memory_space<vmem>>, vector<2x1xf32>,
    return
  }
}

</mosaic_0001>

<llo_original>
// kernel: tpu_custom_call.1
$region0: #{tpu_custom_call.1}
  #allocation0 [shape = 'u32[]', space=smem, size = 0x4, offset = 0x4, fixed_abs, tag = 'smem constant byte address 0x4 - core index']
  #allocation1 [shape = 'u32[72,128]{1,0:T(1,128)}', space=vmem, size = 0x9000, scoped, tag = 'internal scratch']
  %s0 = inlined_call_operand.hbm [shape: bf16[16,128], index: 0, kind: input, shape index: {}]
  %s1 = inlined_call_operand.vmem [shape: f32[2,128], index: 1, kind: input, shape index: {}]
  %s2 = inlined_call_operand.hbm [shape: f32[2,16], index: 2, kind: input, shape index: {}]
  %s3 = inlined_call_operand.hbm [shape: bf16[128,128], index: 3, kind: input, shape index: {}]
  %s4 = inlined_call_operand.vmem [shape: f32[1,128], index: 4, kind: input, shape index: {}]
  %s5 = inlined_call_operand.hbm [shape: bf16[128,128], index: 5, kind: input, shape index: {}]
  %s6 = inlined_call_operand.hbm [shape: f32[1,128], index: 6, kind: input, shape index: {}]
  %s7 = inlined_call_operand.hbm [shape: bf16[128,128], index: 7, kind: input, shape index: {}]
  %s8 = inlined_call_operand.vmem [shape: f32[1,128], index: 8, kind: input, shape index: {}]
  %s9 = inlined_call_operand.hbm [shape: bf16[128,128], index: 9, kind: input, shape index: {}]
  %s10 = inlined_call_operand.vmem [shape: f32[1,128], index: 10, kind: input, shape index: {}]
  %s11 = inlined_call_operand.vmem [shape: f32[1,128], index: 11, kind: input, shape index: {}]
  %s12 = inlined_call_operand.vmem [shape: f32[1,128], index: 12, kind: input, shape index: {}]
  %s13 = inlined_call_operand.hbm [shape: bf16[128,256], index: 13, kind: input, shape index: {}]
  %s14 = inlined_call_operand.vmem [shape: f32[1,256], index: 14, kind: input, shape index: {}]
  %s15 = inlined_call_operand.hbm [shape: bf16[256,128], index: 15, kind: input, shape index: {}]
  %s16 = inlined_call_operand.vmem [shape: f32[1,128], index: 16, kind: input, shape index: {}]
  %s17 = inlined_call_operand.vmem [shape: f32[1,128], index: 17, kind: input, shape index: {}]
  %s18 = inlined_call_operand.vmem [shape: f32[1,128], index: 18, kind: input, shape index: {}]
  %s19 = inlined_call_operand.vmem [shape: f32[2,128], index: 19, kind: input, shape index: {}]
  %s20 = inlined_call_operand.vmem [shape: f32[2,1], index: 20, kind: input, shape index: {}]
  %s21 = inlined_call_operand.vmem [shape: f32[2,1], index: 21, kind: output, shape index: {}]
  %s22 = sld [smem:[#allocation0]]
  $region130: #{tpu_custom_call.1} parent=0
    _
  %s24 = ssub.s32 1, %s22
  %s25 = scalar_select 0, %s24, %s22
  $region1: #{tpu_custom_call.1} parent=0
    #allocation2 [shape = 'u8[4096]{0}', space=vmem, size = 0x1000, scoped, tag = 'input window, operand 0, single buffered']
    #allocation3 [shape = 's32[1]{0}', space=sflag, size = 0x4, scoped, tag = 'scoped memory for tpu_custom_call.1']
    #allocation4 [shape = 'u8[1024]{0}', space=vmem, size = 0x400, scoped, tag = 'input window, operand 2, single buffered']
    #allocation5 [shape = 's32[1]{0}', space=sflag, size = 0x4, scoped, tag = 'scoped memory for tpu_custom_call.1']
    #allocation6 [shape = 'u8[32768]{0}', space=vmem, size = 0x8000, scoped, tag = 'input window, operand 3, single buffered']
    #allocation7 [shape = 'u8[32768]{0}', space=vmem, size = 0x8000, scoped, tag = 'input window, operand 5, single buffered']
    #allocation8 [shape = 's32[1]{0}', space=sflag, size = 0x4, scoped, tag = 'scoped memory for tpu_custom_call.1']
    #allocation9 [shape = 'u8[512]{0}', space=vmem, size = 0x400, scoped, tag = 'input window, operand 6, single buffered']
    #allocation10 [shape = 'u8[32768]{0}', space=vmem, size = 0x8000, scoped, tag = 'input window, operand 7, single buffered']
    #allocation11 [shape = 's32[1]{0}', space=sflag, size = 0x4, scoped, tag = 'scoped memory for tpu_custom_call.1']
    #allocation12 [shape = 'u8[32768]{0}', space=vmem, size = 0x8000, scoped, tag = 'input window, operand 9, single buffered']
    #allocation13 [shape = 'u8[65536]{0}', space=vmem, size = 0x10000, scoped, tag = 'input window, operand 13, single buffered']
    #allocation14 [shape = 's32[1]{0}', space=sflag, size = 0x4, scoped, tag = 'scoped memory for tpu_custom_call.1']
    #allocation15 [shape = 'u8[65536]{0}', space=vmem, size = 0x10000, scoped, tag = 'input window, operand 15, single buffered']
    %26 = vsyncpa [#allocation3], 0
    %27 = vsyncpa [#allocation5], 0
    %28 = vsyncpa [#allocation8], 0
    %29 = vsyncpa [#allocation11], 0
    %30 = vsyncpa [#allocation14], 0
    // Predicated region
    $region2: #{tpu_custom_call.1} parent=1 // pred_check
      _
    $region3: #{tpu_custom_call.1} parent=1 // pred_check_branch
      %32 = sbr.rel (0) target = $region5
    $region4: #{tpu_custom_call.1} parent=1 // pred_region
      %34 = vsyncadd [#allocation3], 0
      %s35 = sshll.u32 %s0, 4
      %s36 = int_to_ptr.hbm [resolvable:$true] %s35
      %s37 = sshll.u32 [#allocation2], 4
      %s38 = int_to_ptr.vmem [resolvable:$true] %s37
      %43 = dma.hbm_to_vmem [thread:$0]  %s36, 128, %s38, [#allocation3], 64, 64, 4
    $region5: #{tpu_custom_call.1} parent=1 // pred_fallthru
      _
    // Predicated region
    $region6: #{tpu_custom_call.1} parent=1 // pred_check
      _
    $region7: #{tpu_custom_call.1} parent=1 // pred_check_branch
      %45 = sbr.rel (0) target = $region9
    $region8: #{tpu_custom_call.1} parent=1 // pred_region
      _
    $region9: #{tpu_custom_call.1} parent=1 // pred_fallthru
      _
    // Predicated region
    $region10: #{tpu_custom_call.1} parent=1 // pred_check
      _
    $region11: #{tpu_custom_call.1} parent=1 // pred_check_branch
      %47 = sbr.rel (0) target = $region13
    $region12: #{tpu_custom_call.1} parent=1 // pred_region
      %49 = vsyncadd [#allocation5], 0
      %s51 = sshll.u32 %s2, 4
      %s52 = int_to_ptr.hbm [resolvable:$true] %s51
      %s53 = sshll.u32 [#allocation4], 4
      %s54 = int_to_ptr.vmem [resolvable:$true] %s53
      %56 = dma.hbm_to_vmem [thread:$0]  %s52, 32, %s54, [#allocation5]
    $region13: #{tpu_custom_call.1} parent=1 // pred_fallthru
      _
    // Predicated region
    $region14: #{tpu_custom_call.1} parent=1 // pred_check
      _
    $region15: #{tpu_custom_call.1} parent=1 // pred_check_branch
      %58 = sbr.rel (0) target = $region17
    $region16: #{tpu_custom_call.1} parent=1 // pred_region
      %60 = vsyncadd [#allocation5], 0
      %s61 = sshll.u32 %s3, 4
      %s62 = int_to_ptr.hbm [resolvable:$true] %s61
      %s63 = sshll.u32 [#allocation6], 4
      %s64 = int_to_ptr.vmem [resolvable:$true] %s63
      %69 = dma.hbm_to_vmem [thread:$0]  %s62, 1024, %s64, [#allocation5], 64, 64, 4
    $region17: #{tpu_custom_call.1} parent=1 // pred_fallthru
      _
    // Predicated region
    $region18: #{tpu_custom_call.1} parent=1 // pred_check
      _
    $region19: #{tpu_custom_call.1} parent=1 // pred_check_branch
      %71 = sbr.rel (0) target = $region21
    $region20: #{tpu_custom_call.1} parent=1 // pred_region
      _
    $region21: #{tpu_custom_call.1} parent=1 // pred_fallthru
      _
    // Predicated region
    $region22: #{tpu_custom_call.1} parent=1 // pred_check
      _
    $region23: #{tpu_custom_call.1} parent=1 // pred_check_branch
      %73 = sbr.rel (0) target = $region25
    $region24: #{tpu_custom_call.1} parent=1 // pred_region
      %75 = vsyncadd [#allocation8], 0
      %s76 = sshll.u32 %s5, 4
      %s77 = int_to_ptr.hbm [resolvable:$true] %s76
      %s78 = sshll.u32 [#allocation7], 4
      %s79 = int_to_ptr.vmem [resolvable:$true] %s78
      %84 = dma.hbm_to_vmem [thread:$0]  %s77, 1024, %s79, [#allocation8], 64, 64, 4
    $region25: #{tpu_custom_call.1} parent=1 // pred_fallthru
      _
    // Predicated region
    $region26: #{tpu_custom_call.1} parent=1 // pred_check
      _
    $region27: #{tpu_custom_call.1} parent=1 // pred_check_branch
      %86 = sbr.rel (0) target = $region29
    $region28: #{tpu_custom_call.1} parent=1 // pred_region
      %88 = vsyncadd [#allocation8], 0
      %s90 = sshll.u32 %s6, 4
      %s91 = int_to_ptr.hbm [resolvable:$true] %s90
      %s92 = sshll.u32 [#allocation9], 4
      %s93 = int_to_ptr.vmem [resolvable:$true] %s92
      %95 = dma.hbm_to_vmem [thread:$0]  %s91, 16, %s93, [#allocation8]
    $region29: #{tpu_custom_call.1} parent=1 // pred_fallthru
      _
    // Predicated region
    $region30: #{tpu_custom_call.1} parent=1 // pred_check
      _
    $region31: #{tpu_custom_call.1} parent=1 // pred_check_branch
      %97 = sbr.rel (0) target = $region33
    $region32: #{tpu_custom_call.1} parent=1 // pred_region
      %99 = vsyncadd [#allocation11], 0
      %s100 = sshll.u32 %s7, 4
      %s101 = int_to_ptr.hbm [resolvable:$true] %s100
      %s102 = sshll.u32 [#allocation10], 4
      %s103 = int_to_ptr.vmem [resolvable:$true] %s102
      %108 = dma.hbm_to_vmem [thread:$0]  %s101, 1024, %s103, [#allocation11], 64, 64, 4
    $region33: #{tpu_custom_call.1} parent=1 // pred_fallthru
      _
    // Predicated region
    $region34: #{tpu_custom_call.1} parent=1 // pred_check
      _
    $region35: #{tpu_custom_call.1} parent=1 // pred_check_branch
      %110 = sbr.rel (0) target = $region37
    $region36: #{tpu_custom_call.1} parent=1 // pred_region
      _
    $region37: #{tpu_custom_call.1} parent=1 // pred_fallthru
      _
    // Predicated region
    $region38: #{tpu_custom_call.1} parent=1 // pred_check
      _
    $region39: #{tpu_custom_call.1} parent=1 // pred_check_branch
      %112 = sbr.rel (0) target = $region41
    $region40: #{tpu_custom_call.1} parent=1 // pred_region
      %114 = vsyncadd [#allocation11], 0
      %s115 = sshll.u32 %s9, 4
      %s116 = int_to_ptr.hbm [resolvable:$true] %s115
      %s117 = sshll.u32 [#allocation12], 4
      %s118 = int_to_ptr.vmem [resolvable:$true] %s117
      %123 = dma.hbm_to_vmem [thread:$0]  %s116, 1024, %s118, [#allocation11], 64, 64, 4
    $region41: #{tpu_custom_call.1} parent=1 // pred_fallthru
      _
    // Predicated region
    $region42: #{tpu_custom_call.1} parent=1 // pred_check
      _
    $region43: #{tpu_custom_call.1} parent=1 // pred_check_branch
      %125 = sbr.rel (0) target = $region45
    $region44: #{tpu_custom_call.1} parent=1 // pred_region
      _
    $region45: #{tpu_custom_call.1} parent=1 // pred_fallthru
      _
    // Predicated region
    $region46: #{tpu_custom_call.1} parent=1 // pred_check
      _
    $region47: #{tpu_custom_call.1} parent=1 // pred_check_branch
      %127 = sbr.rel (0) target = $region49
    $region48: #{tpu_custom_call.1} parent=1 // pred_region
      _
    $region49: #{tpu_custom_call.1} parent=1 // pred_fallthru
      _
    // Predicated region
    $region50: #{tpu_custom_call.1} parent=1 // pred_check
      _
    $region51: #{tpu_custom_call.1} parent=1 // pred_check_branch
      %129 = sbr.rel (0) target = $region53
    $region52: #{tpu_custom_call.1} parent=1 // pred_region
      _
    $region53: #{tpu_custom_call.1} parent=1 // pred_fallthru
      _
    // Predicated region
    $region54: #{tpu_custom_call.1} parent=1 // pred_check
      _
    $region55: #{tpu_custom_call.1} parent=1 // pred_check_branch
      %131 = sbr.rel (0) target = $region57
    $region56: #{tpu_custom_call.1} parent=1 // pred_region
      %133 = vsyncadd [#allocation14], 0
      %s134 = sshll.u32 %s13, 4
      %s135 = int_to_ptr.hbm [resolvable:$true] %s134
      %s136 = sshll.u32 [#allocation13], 4
      %s137 = int_to_ptr.vmem [resolvable:$true] %s136
      %142 = dma.hbm_to_vmem [thread:$0]  %s135, 2048, %s137, [#allocation14], 128, 128, 8
    $region57: #{tpu_custom_call.1} parent=1 // pred_fallthru
      _
    // Predicated region
    $region58: #{tpu_custom_call.1} parent=1 // pred_check
      _
    $region59: #{tpu_custom_call.1} parent=1 // pred_check_branch
      %144 = sbr.rel (0) target = $region61
    $region60: #{tpu_custom_call.1} parent=1 // pred_region
      _
    $region61: #{tpu_custom_call.1} parent=1 // pred_fallthru
      _
    // Predicated region
    $region62: #{tpu_custom_call.1} parent=1 // pred_check
      _
    $region63: #{tpu_custom_call.1} parent=1 // pred_check_branch
      %146 = sbr.rel (0) target = $region65
    $region64: #{tpu_custom_call.1} parent=1 // pred_region
      %148 = vsyncadd [#allocation14], 0
      %s149 = sshll.u32 %s15, 4
      %s150 = int_to_ptr.hbm [resolvable:$true] %s149
      %s151 = sshll.u32 [#allocation15], 4
      %s152 = int_to_ptr.vmem [resolvable:$true] %s151
      %157 = dma.hbm_to_vmem [thread:$0]  %s150, 2048, %s152, [#allocation14], 64, 64, 4
    $region65: #{tpu_custom_call.1} parent=1 // pred_fallthru
      _
    // Predicated region
    $region66: #{tpu_custom_call.1} parent=1 // pred_check
      _
    $region67: #{tpu_custom_call.1} parent=1 // pred_check_branch
      %159 = sbr.rel (0) target = $region69
    $region68: #{tpu_custom_call.1} parent=1 // pred_region
      _
    $region69: #{tpu_custom_call.1} parent=1 // pred_fallthru
      _
    // Predicated region
    $region70: #{tpu_custom_call.1} parent=1 // pred_check
      _
    $region71: #{tpu_custom_call.1} parent=1 // pred_check_branch
      %161 = sbr.rel (0) target = $region73
    $region72: #{tpu_custom_call.1} parent=1 // pred_region
      _
    $region73: #{tpu_custom_call.1} parent=1 // pred_fallthru
      _
    // Predicated region
    $region74: #{tpu_custom_call.1} parent=1 // pred_check
      _
    $region75: #{tpu_custom_call.1} parent=1 // pred_check_branch
      %163 = sbr.rel (0) target = $region77
    $region76: #{tpu_custom_call.1} parent=1 // pred_region
      _
    $region77: #{tpu_custom_call.1} parent=1 // pred_fallthru
      _
    // Predicated region
    $region78: #{tpu_custom_call.1} parent=1 // pred_check
      _
    $region79: #{tpu_custom_call.1} parent=1 // pred_check_branch
      %165 = sbr.rel (0) target = $region81
    $region80: #{tpu_custom_call.1} parent=1 // pred_region
      _
    $region81: #{tpu_custom_call.1} parent=1 // pred_fallthru
      _
    // Predicated region
    $region82: #{tpu_custom_call.1} parent=1 // pred_check
      _
    $region83: #{tpu_custom_call.1} parent=1 // pred_check_branch
      %167 = sbr.rel (0) target = $region85
    $region84: #{tpu_custom_call.1} parent=1 // pred_region
      _
    $region85: #{tpu_custom_call.1} parent=1 // pred_fallthru
      _
    // Predicated region
    $region86: #{tpu_custom_call.1} parent=1 // pred_check
      _
    $region87: #{tpu_custom_call.1} parent=1 // pred_check_branch
      %169 = sbr.rel (0) target = $region89
    $region88: #{tpu_custom_call.1} parent=1 // pred_region
      %171 = dma.done [#allocation3], 128
    $region89: #{tpu_custom_call.1} parent=1 // pred_fallthru
      _
    // Predicated region
    $region90: #{tpu_custom_call.1} parent=1 // pred_check
      _
    $region91: #{tpu_custom_call.1} parent=1 // pred_check_branch
      %173 = sbr.rel (0) target = $region93
    $region92: #{tpu_custom_call.1} parent=1 // pred_region
      %175 = dma.done [#allocation5], 32
    $region93: #{tpu_custom_call.1} parent=1 // pred_fallthru
      _
    // Predicated region
    $region94: #{tpu_custom_call.1} parent=1 // pred_check
      _
    $region95: #{tpu_custom_call.1} parent=1 // pred_check_branch
      %177 = sbr.rel (0) target = $region97
    $region96: #{tpu_custom_call.1} parent=1 // pred_region
      %179 = dma.done [#allocation5], 1024
    $region97: #{tpu_custom_call.1} parent=1 // pred_fallthru
      _
    // Predicated region
    $region98: #{tpu_custom_call.1} parent=1 // pred_check
      _
    $region99: #{tpu_custom_call.1} parent=1 // pred_check_branch
      %181 = sbr.rel (0) target = $region101
    $region100: #{tpu_custom_call.1} parent=1 // pred_region
      %183 = dma.done [#allocation8], 1024
    $region101: #{tpu_custom_call.1} parent=1 // pred_fallthru
      _
    // Predicated region
    $region102: #{tpu_custom_call.1} parent=1 // pred_check
      _
    $region103: #{tpu_custom_call.1} parent=1 // pred_check_branch
      %185 = sbr.rel (0) target = $region105
    $region104: #{tpu_custom_call.1} parent=1 // pred_region
      %187 = dma.done [#allocation8], 16
    $region105: #{tpu_custom_call.1} parent=1 // pred_fallthru
      _
    // Predicated region
    $region106: #{tpu_custom_call.1} parent=1 // pred_check
      _
    $region107: #{tpu_custom_call.1} parent=1 // pred_check_branch
      %189 = sbr.rel (0) target = $region109
    $region108: #{tpu_custom_call.1} parent=1 // pred_region
      %191 = dma.done [#allocation11], 1024
    $region109: #{tpu_custom_call.1} parent=1 // pred_fallthru
      _
    // Predicated region
    $region110: #{tpu_custom_call.1} parent=1 // pred_check
      _
    $region111: #{tpu_custom_call.1} parent=1 // pred_check_branch
      %193 = sbr.rel (0) target = $region113
    $region112: #{tpu_custom_call.1} parent=1 // pred_region
      %195 = dma.done [#allocation11], 1024
    $region113: #{tpu_custom_call.1} parent=1 // pred_fallthru
      _
    // Predicated region
    $region114: #{tpu_custom_call.1} parent=1 // pred_check
      _
    $region115: #{tpu_custom_call.1} parent=1 // pred_check_branch
      %197 = sbr.rel (0) target = $region117
    $region116: #{tpu_custom_call.1} parent=1 // pred_region
      %199 = dma.done [#allocation14], 2048
    $region117: #{tpu_custom_call.1} parent=1 // pred_fallthru
      _
    // Predicated region
    $region118: #{tpu_custom_call.1} parent=1 // pred_check
      _
    $region119: #{tpu_custom_call.1} parent=1 // pred_check_branch
      %201 = sbr.rel (0) target = $region121
    $region120: #{tpu_custom_call.1} parent=1 // pred_region
      %203 = dma.done [#allocation14], 2048
    $region121: #{tpu_custom_call.1} parent=1 // pred_fallthru
      _
    %v205 = vld [vmem:[#allocation2] sm:$0xf]
    %v206 = vld [vmem:[#allocation2 + $0x4] sm:$0xf]
    %v207 = vld [vmem:[%s1] sm:$0x3]
    %v208 = vld [vmem:[#allocation7] sm:$0xf]
    %v209 = vld [vmem:[#allocation7 + $0x4] sm:$0xf]
    %v210 = vld [vmem:[#allocation7 + $0x8] sm:$0xf]
    %v211 = vld [vmem:[#allocation7 + $0xc] sm:$0xf]
    %v212 = vld [vmem:[#allocation7 + $0x10] sm:$0xf]
    %v213 = vld [vmem:[#allocation7 + $0x14] sm:$0xf]
    %v214 = vld [vmem:[#allocation7 + $0x18] sm:$0xf]
    %v215 = vld [vmem:[#allocation7 + $0x1c] sm:$0xf]
    %v216 = vld [vmem:[#allocation7 + $0x20] sm:$0xf]
    %v217 = vld [vmem:[#allocation7 + $0x24] sm:$0xf]
    %v218 = vld [vmem:[#allocation7 + $0x28] sm:$0xf]
    %v219 = vld [vmem:[#allocation7 + $0x2c] sm:$0xf]
    %v220 = vld [vmem:[#allocation7 + $0x30] sm:$0xf]
    %v221 = vld [vmem:[#allocation7 + $0x34] sm:$0xf]
    %v222 = vld [vmem:[#allocation7 + $0x38] sm:$0xf]
    %v223 = vld [vmem:[#allocation7 + $0x3c] sm:$0xf]
    %v224 = vld [vmem:[#allocation9] sm:$0x1]
    %v226 = vperm.slane %v224, 0
    %v230 = vunpack.c.l.b16 %v205
    %v231 = vunpack.c.l.b16 %v206
    %v232 = vpack.c.b16 %v231, %v230
    %v250 = vunpack.c.l.b16 %v208
    %v251 = vunpack.c.l.b16 %v209
    %v252 = vunpack.c.l.b16 %v210
    %v253 = vunpack.c.l.b16 %v211
    %v254 = vunpack.c.l.b16 %v212
    %v255 = vunpack.c.l.b16 %v213
    %v256 = vunpack.c.l.b16 %v214
    %v257 = vunpack.c.l.b16 %v215
    %v258 = vunpack.c.l.b16 %v216
    %v259 = vunpack.c.l.b16 %v217
    %v260 = vunpack.c.l.b16 %v218
    %v261 = vunpack.c.l.b16 %v219
    %v262 = vunpack.c.l.b16 %v220
    %v263 = vunpack.c.l.b16 %v221
    %v264 = vunpack.c.l.b16 %v222
    %v265 = vunpack.c.l.b16 %v223
    %v266 = vpack.c.b16 %v251, %v250
    %v267 = vpack.c.b16 %v253, %v252
    %v268 = vpack.c.b16 %v255, %v254
    %v269 = vpack.c.b16 %v257, %v256
    %v270 = vpack.c.b16 %v259, %v258
    %v271 = vpack.c.b16 %v261, %v260
    %v272 = vpack.c.b16 %v263, %v262
    %v273 = vpack.c.b16 %v265, %v264
    %282 = vmatpush.bf16.msra.mxu0 %v273
    %283 = vmatpush.bf16.msra.mxu0 %v272
    %284 = vmatpush.bf16.msra.mxu0 %v271
    %285 = vmatpush.bf16.msra.mxu0 %v270
    %286 = vmatpush.bf16.msra.mxu0 %v269
    %287 = vmatpush.bf16.msra.mxu0 %v268
    %288 = vmatpush.bf16.msra.mxu0 %v267
    %289 = vmatpush.bf16.msra.mxu0 %v266
    %290 = vmatmul.bf16.gmra.mxu0 %v232
    %v291 = vpop.f32.mrf.mxu0
    %v292 = vadd.f32 %v226, %v291
    %v293 = vpop.f32.mrf.mxu0
    %v294 = vadd.f32 %v226, %v293
    %295 = vdwg.mxu0
    %v296 = vld [vmem:[#allocation10] sm:$0xf]
    %v297 = vld [vmem:[#allocation10 + $0x4] sm:$0xf]
    %v298 = vld [vmem:[#allocation10 + $0x8] sm:$0xf]
    %v299 = vld [vmem:[#allocation10 + $0xc] sm:$0xf]
    %v300 = vld [vmem:[#allocation10 + $0x10] sm:$0xf]
    %v301 = vld [vmem:[#allocation10 + $0x14] sm:$0xf]
    %v302 = vld [vmem:[#allocation10 + $0x18] sm:$0xf]
    %v303 = vld [vmem:[#allocation10 + $0x1c] sm:$0xf]
    %v304 = vld [vmem:[#allocation10 + $0x20] sm:$0xf]
    %v305 = vld [vmem:[#allocation10 + $0x24] sm:$0xf]
    %v306 = vld [vmem:[#allocation10 + $0x28] sm:$0xf]
    %v307 = vld [vmem:[#allocation10 + $0x2c] sm:$0xf]
    %v308 = vld [vmem:[#allocation10 + $0x30] sm:$0xf]
    %v309 = vld [vmem:[#allocation10 + $0x34] sm:$0xf]
    %v310 = vld [vmem:[#allocation10 + $0x38] sm:$0xf]
    %v311 = vld [vmem:[#allocation10 + $0x3c] sm:$0xf]
    %v312 = vld [vmem:[%s8] sm:$0x1]
    %v314 = vperm.slane %v312, 0
    %v332 = vunpack.c.l.b16 %v296
    %v333 = vunpack.c.l.b16 %v297
    %v334 = vunpack.c.l.b16 %v298
    %v335 = vunpack.c.l.b16 %v299
    %v336 = vunpack.c.l.b16 %v300
    %v337 = vunpack.c.l.b16 %v301
    %v338 = vunpack.c.l.b16 %v302
    %v339 = vunpack.c.l.b16 %v303
    %v340 = vunpack.c.l.b16 %v304
    %v341 = vunpack.c.l.b16 %v305
    %v342 = vunpack.c.l.b16 %v306
    %v343 = vunpack.c.l.b16 %v307
    %v344 = vunpack.c.l.b16 %v308
    %v345 = vunpack.c.l.b16 %v309
    %v346 = vunpack.c.l.b16 %v310
    %v347 = vunpack.c.l.b16 %v311
    %v348 = vpack.c.b16 %v333, %v332
    %v349 = vpack.c.b16 %v335, %v334
    %v350 = vpack.c.b16 %v337, %v336
    %v351 = vpack.c.b16 %v339, %v338
    %v352 = vpack.c.b16 %v341, %v340
    %v353 = vpack.c.b16 %v343, %v342
    %v354 = vpack.c.b16 %v345, %v344
    %v355 = vpack.c.b16 %v347, %v346
    %364 = vmatpush.bf16.msra.mxu0 %v355
    %365 = vmatpush.bf16.msra.mxu0 %v354
    %366 = vmatpush.bf16.msra.mxu0 %v353
    %367 = vmatpush.bf16.msra.mxu0 %v352
    %368 = vmatpush.bf16.msra.mxu0 %v351
    %369 = vmatpush.bf16.msra.mxu0 %v350
    %370 = vmatpush.bf16.msra.mxu0 %v349
    %371 = vmatpush.bf16.msra.mxu0 %v348
    %372 = vmatmul.bf16.gmra.mxu0 %v232
    %v373 = vpop.f32.mrf.mxu0
    %v374 = vadd.f32 %v314, %v373
    %v375 = vpop.f32.mrf.mxu0
    %v376 = vadd.f32 %v314, %v375
    %377 = vdwg.mxu0
    %v378 = vpack.c.bf16 %v207, %v207
    %v379 = vld [vmem:[#allocation6] sm:$0xf]
    %v380 = vld [vmem:[#allocation6 + $0x4] sm:$0xf]
    %v381 = vld [vmem:[#allocation6 + $0x8] sm:$0xf]
    %v382 = vld [vmem:[#allocation6 + $0xc] sm:$0xf]
    %v383 = vld [vmem:[#allocation6 + $0x10] sm:$0xf]
    %v384 = vld [vmem:[#allocation6 + $0x14] sm:$0xf]
    %v385 = vld [vmem:[#allocation6 + $0x18] sm:$0xf]
    %v386 = vld [vmem:[#allocation6 + $0x1c] sm:$0xf]
    %v387 = vld [vmem:[#allocation6 + $0x20] sm:$0xf]
    %v388 = vld [vmem:[#allocation6 + $0x24] sm:$0xf]
    %v389 = vld [vmem:[#allocation6 + $0x28] sm:$0xf]
    %v390 = vld [vmem:[#allocation6 + $0x2c] sm:$0xf]
    %v391 = vld [vmem:[#allocation6 + $0x30] sm:$0xf]
    %v392 = vld [vmem:[#allocation6 + $0x34] sm:$0xf]
    %v393 = vld [vmem:[#allocation6 + $0x38] sm:$0xf]
    %v394 = vld [vmem:[#allocation6 + $0x3c] sm:$0xf]
    %v395 = vld [vmem:[%s4] sm:$0x1]
    %v397 = vperm.slane %v395, 0
    %v415 = vunpack.c.l.b16 %v379
    %v416 = vunpack.c.l.b16 %v380
    %v417 = vunpack.c.l.b16 %v381
    %v418 = vunpack.c.l.b16 %v382
    %v419 = vunpack.c.l.b16 %v383
    %v420 = vunpack.c.l.b16 %v384
    %v421 = vunpack.c.l.b16 %v385
    %v422 = vunpack.c.l.b16 %v386
    %v423 = vunpack.c.l.b16 %v387
    %v424 = vunpack.c.l.b16 %v388
    %v425 = vunpack.c.l.b16 %v389
    %v426 = vunpack.c.l.b16 %v390
    %v427 = vunpack.c.l.b16 %v391
    %v428 = vunpack.c.l.b16 %v392
    %v429 = vunpack.c.l.b16 %v393
    %v430 = vunpack.c.l.b16 %v394
    %v431 = vpack.c.b16 %v416, %v415
    %v432 = vpack.c.b16 %v418, %v417
    %v433 = vpack.c.b16 %v420, %v419
    %v434 = vpack.c.b16 %v422, %v421
    %v435 = vpack.c.b16 %v424, %v423
    %v436 = vpack.c.b16 %v426, %v425
    %v437 = vpack.c.b16 %v428, %v427
    %v438 = vpack.c.b16 %v430, %v429
    %447 = vmatpush.bf16.msra.mxu0 %v438
    %448 = vmatpush.bf16.msra.mxu0 %v437
    %449 = vmatpush.bf16.msra.mxu0 %v436
    %450 = vmatpush.bf16.msra.mxu0 %v435
    %451 = vmatpush.bf16.msra.mxu0 %v434
    %452 = vmatpush.bf16.msra.mxu0 %v433
    %453 = vmatpush.bf16.msra.mxu0 %v432
    %454 = vmatpush.bf16.msra.mxu0 %v431
    %455 = vmatmul.bf16.gmra.mxu0 %v378
    %v456 = vpop.f32.mrf.mxu0
    %v457 = vadd.f32 %v397, %v456
    %v458 = vpop.f32.mrf.mxu0
    %459 = vdwg.mxu0
    %v460 = vpack.c.bf16 %v457, %v457
    %v461 = vpack.c.bf16 %v294, %v292
    %462 = vmatpush.bf16.xpose.msra.mxu0 0
    %463 = vmatpush.bf16.xpose.msra.mxu0 0
    %464 = vmatpush.bf16.xpose.msra.mxu0 0
    %465 = vmatpush.bf16.xpose.msra.mxu0 0
    %466 = vmatpush.bf16.xpose.msra.mxu0 0
    %467 = vmatpush.bf16.xpose.msra.mxu0 0
    %468 = vmatpush.bf16.xpose.msra.mxu0 0
    %469 = vmatpush.bf16.xpose.msra.mxu0 %v461
    %470 = vmatmul.bf16.gmra.mxu0 %v460
    %v471 = vpop.f32.mrf.mxu0
    %v472 = vadd.f32 0.0, %v471
    %v473 = vpop.f32.mrf.mxu0
    %474 = vdwg.mxu0
    %v475 = vmul.f32 %v472, 0.088388346
    %v476 = vld [vmem:[#allocation4] sm:$0x3]
    %v477 = vadd.f32 %v475, %v476
    %vm478 = vcmask 123904
    %v479 = vsel %vm478, %v477, -inf
    %480 = vmax.xlane.f32.xlu0 %v479
    %v481 = vpop.xlane.xlu0 %480
    %v482 = vsub.f32 %v477, %v481
    %v483 = vmul.f32 %v482, 1.442695
    %v484 = vpow.pop %v483
    %v485 = vsel %vm478, %v484, 0.0
    %486 = vadd.xlane.f32.xlu0 %v485
    %v487 = vpop.xlane.xlu0 %486
    %v488 = vrcp.pop %v487
    %v489 = vmul.f32 %v484, %v488
    %v490 = vpack.c.bf16 %v489, %v489
    %v491 = vpack.c.bf16 %v376, %v374
    %vm492 = vcmask 130048
    %v494 = vsel %vm492, %v490, 0
    %496 = vmatpush.bf16.msra.mxu0 0
    %497 = vmatpush.bf16.msra.mxu0 0
    %498 = vmatpush.bf16.msra.mxu0 0
    %499 = vmatpush.bf16.msra.mxu0 0
    %500 = vmatpush.bf16.msra.mxu0 0
    %501 = vmatpush.bf16.msra.mxu0 0
    %502 = vmatpush.bf16.msra.mxu0 0
    %503 = vmatpush.bf16.msra.mxu0 %v491
    %504 = vmatmul.bf16.gmra.mxu0 %v494
    %v505 = vpop.f32.mrf.mxu0
    %v506 = vadd.f32 0.0, %v505
    %v507 = vpop.f32.mrf.mxu0
    %508 = vdwg.mxu0
    %v509 = vpack.c.bf16 %v506, %v506
    %v510 = vld [vmem:[#allocation12] sm:$0xf]
    %v511 = vld [vmem:[#allocation12 + $0x4] sm:$0xf]
    %v512 = vld [vmem:[#allocation12 + $0x8] sm:$0xf]
    %v513 = vld [vmem:[#allocation12 + $0xc] sm:$0xf]
    %v514 = vld [vmem:[#allocation12 + $0x10] sm:$0xf]
    %v515 = vld [vmem:[#allocation12 + $0x14] sm:$0xf]
    %v516 = vld [vmem:[#allocation12 + $0x18] sm:$0xf]
    %v517 = vld [vmem:[#allocation12 + $0x1c] sm:$0xf]
    %v518 = vld [vmem:[#allocation12 + $0x20] sm:$0xf]
    %v519 = vld [vmem:[#allocation12 + $0x24] sm:$0xf]
    %v520 = vld [vmem:[#allocation12 + $0x28] sm:$0xf]
    %v521 = vld [vmem:[#allocation12 + $0x2c] sm:$0xf]
    %v522 = vld [vmem:[#allocation12 + $0x30] sm:$0xf]
    %v523 = vld [vmem:[#allocation12 + $0x34] sm:$0xf]
    %v524 = vld [vmem:[#allocation12 + $0x38] sm:$0xf]
    %v525 = vld [vmem:[#allocation12 + $0x3c] sm:$0xf]
    %v526 = vld [vmem:[%s10] sm:$0x1]
    %v528 = vperm.slane %v526, 0
    %v546 = vunpack.c.l.b16 %v510
    %v547 = vunpack.c.l.b16 %v511
    %v548 = vunpack.c.l.b16 %v512
    %v549 = vunpack.c.l.b16 %v513
    %v550 = vunpack.c.l.b16 %v514
    %v551 = vunpack.c.l.b16 %v515
    %v552 = vunpack.c.l.b16 %v516
    %v553 = vunpack.c.l.b16 %v517
    %v554 = vunpack.c.l.b16 %v518
    %v555 = vunpack.c.l.b16 %v519
    %v556 = vunpack.c.l.b16 %v520
    %v557 = vunpack.c.l.b16 %v521
    %v558 = vunpack.c.l.b16 %v522
    %v559 = vunpack.c.l.b16 %v523
    %v560 = vunpack.c.l.b16 %v524
    %v561 = vunpack.c.l.b16 %v525
    %v562 = vpack.c.b16 %v547, %v546
    %v563 = vpack.c.b16 %v549, %v548
    %v564 = vpack.c.b16 %v551, %v550
    %v565 = vpack.c.b16 %v553, %v552
    %v566 = vpack.c.b16 %v555, %v554
    %v567 = vpack.c.b16 %v557, %v556
    %v568 = vpack.c.b16 %v559, %v558
    %v569 = vpack.c.b16 %v561, %v560
    %578 = vmatpush.bf16.msra.mxu0 %v569
    %579 = vmatpush.bf16.msra.mxu0 %v568
    %580 = vmatpush.bf16.msra.mxu0 %v567
    %581 = vmatpush.bf16.msra.mxu0 %v566
    %582 = vmatpush.bf16.msra.mxu0 %v565
    %583 = vmatpush.bf16.msra.mxu0 %v564
    %584 = vmatpush.bf16.msra.mxu0 %v563
    %585 = vmatpush.bf16.msra.mxu0 %v562
    %586 = vmatmul.bf16.gmra.mxu0 %v509
    %v587 = vpop.f32.mrf.mxu0
    %v588 = vadd.f32 %v528, %v587
    %v589 = vpop.f32.mrf.mxu0
    %590 = vdwg.mxu0
    %v591 = vadd.f32 %v207, %v588
    %v592 = vld [vmem:[%s11] sm:$0x1]
    %v593 = vld [vmem:[%s12] sm:$0x1]
    %vm594 = vcmask 1041408
    %v595 = vsel %vm594, %v591, 0.0
    %596 = vadd.xlane.f32.xlu0 %v595
    %v597 = vpop.xlane.xlu0 %596
    %v598 = vrcp.pop 128.0
    %v599 = vmul.f32 128.0, %v598
    %v600 = vsub.f32 1.0, %v599
    %v601 = vmul.f32 %v598, %v600
    %v602 = vadd.f32 %v598, %v601
    %vm603 = vweird.f32 %v598
    %v604 = vsel %vm603, %v598, %v602
    %v605 = vmul.f32 %v597, %v604
    %v606 = vsub.f32 %v591, %v605
    %v607 = vmul.f32 %v606, %v606
    %v608 = vsel %vm594, %v607, 0.0
    %609 = vadd.xlane.f32.xlu0 %v608
    %v610 = vpop.xlane.xlu0 %609
    %v611 = vmul.f32 %v610, %v604
    %v612 = vadd.f32 %v611, 1e-05
    %v613 = vrsqrt.pop %v612
    %v614 = vmul.f32 %v613, %v612
    %v615 = vmul.f32 %v614, %v613
    %v616 = vmul.f32 0.5, %v615
    %v617 = vsub.f32 1.5, %v616
    %v618 = vmul.f32 %v613, %v617
    %vm619 = vweird.f32 %v612
    %vm620 = vweird.f32 %v613
    %vm621 = vmor %vm619, %vm620
    %v622 = vsel %vm621, %v613, %v618
    %v623 = vmul.f32 %v606, %v622
    %v625 = vperm.slane %v592, 0
    %v627 = vmul.f32 %v623, %v625
    %v629 = vperm.slane %v593, 0
    %v631 = vadd.f32 %v627, %v629
    %v632 = vpack.c.bf16 %v631, %v631
    %v633 = vld [vmem:[#allocation13] sm:$0xff]
    %v634 = vld [vmem:[#allocation13 + $0x8] sm:$0xff]
    %v635 = vld [vmem:[#allocation13 + $0x10] sm:$0xff]
    %v636 = vld [vmem:[#allocation13 + $0x18] sm:$0xff]
    %v637 = vld [vmem:[#allocation13 + $0x20] sm:$0xff]
    %v638 = vld [vmem:[#allocation13 + $0x28] sm:$0xff]
    %v639 = vld [vmem:[#allocation13 + $0x30] sm:$0xff]
    %v640 = vld [vmem:[#allocation13 + $0x38] sm:$0xff]
    %v641 = vld [vmem:[#allocation13 + $0x40] sm:$0xff]
    %v642 = vld [vmem:[#allocation13 + $0x48] sm:$0xff]
    %v643 = vld [vmem:[#allocation13 + $0x50] sm:$0xff]
    %v644 = vld [vmem:[#allocation13 + $0x58] sm:$0xff]
    %v645 = vld [vmem:[#allocation13 + $0x60] sm:$0xff]
    %v646 = vld [vmem:[#allocation13 + $0x68] sm:$0xff]
    %v647 = vld [vmem:[#allocation13 + $0x70] sm:$0xff]
    %v648 = vld [vmem:[#allocation13 + $0x78] sm:$0xff]
    %v649 = vld [vmem:[%s14] sm:$0x3]
    %v651 = vperm.slane %v649, 0
    %v652 = vperm.slane %v649, 1
    %v671 = vunpack.c.l.b16 %v633
    %v672 = vunpack.c.h.b16 %v633
    %v673 = vunpack.c.l.b16 %v634
    %v674 = vunpack.c.h.b16 %v634
    %v675 = vunpack.c.l.b16 %v635
    %v676 = vunpack.c.h.b16 %v635
    %v677 = vunpack.c.l.b16 %v636
    %v678 = vunpack.c.h.b16 %v636
    %v679 = vunpack.c.l.b16 %v637
    %v680 = vunpack.c.h.b16 %v637
    %v681 = vunpack.c.l.b16 %v638
    %v682 = vunpack.c.h.b16 %v638
    %v683 = vunpack.c.l.b16 %v639
    %v684 = vunpack.c.h.b16 %v639
    %v685 = vunpack.c.l.b16 %v640
    %v686 = vunpack.c.h.b16 %v640
    %v687 = vunpack.c.l.b16 %v641
    %v688 = vunpack.c.h.b16 %v641
    %v689 = vunpack.c.l.b16 %v642
    %v690 = vunpack.c.h.b16 %v642
    %v691 = vunpack.c.l.b16 %v643
    %v692 = vunpack.c.h.b16 %v643
    %v693 = vunpack.c.l.b16 %v644
    %v694 = vunpack.c.h.b16 %v644
    %v695 = vunpack.c.l.b16 %v645
    %v696 = vunpack.c.h.b16 %v645
    %v697 = vunpack.c.l.b16 %v646
    %v698 = vunpack.c.h.b16 %v646
    %v699 = vunpack.c.l.b16 %v647
    %v700 = vunpack.c.h.b16 %v647
    %v701 = vunpack.c.l.b16 %v648
    %v702 = vunpack.c.h.b16 %v648
    %v703 = vpack.c.b16 %v673, %v671
    %v704 = vpack.c.b16 %v674, %v672
    %v705 = vpack.c.b16 %v677, %v675
    %v706 = vpack.c.b16 %v678, %v676
    %v707 = vpack.c.b16 %v681, %v679
    %v708 = vpack.c.b16 %v682, %v680
    %v709 = vpack.c.b16 %v685, %v683
    %v710 = vpack.c.b16 %v686, %v684
    %v711 = vpack.c.b16 %v689, %v687
    %v712 = vpack.c.b16 %v690, %v688
    %v713 = vpack.c.b16 %v693, %v691
    %v714 = vpack.c.b16 %v694, %v692
    %v715 = vpack.c.b16 %v697, %v695
    %v716 = vpack.c.b16 %v698, %v696
    %v717 = vpack.c.b16 %v701, %v699
    %v718 = vpack.c.b16 %v702, %v700
    %735 = vmatpush.bf16.msra.mxu0 %v717
    %736 = vmatpush.bf16.msra.mxu0 %v715
    %737 = vmatpush.bf16.msra.mxu0 %v713
    %738 = vmatpush.bf16.msra.mxu0 %v711
    %739 = vmatpush.bf16.msra.mxu0 %v709
    %740 = vmatpush.bf16.msra.mxu0 %v707
    %741 = vmatpush.bf16.msra.mxu0 %v705
    %742 = vmatpush.bf16.msra.mxu0 %v703
    %743 = vmatmul.bf16.gmra.mxu0 %v632
    %v744 = vpop.f32.mrf.mxu0
    %v745 = vadd.f32 %v651, %v744
    %v746 = vpop.f32.mrf.mxu0
    %747 = vdwg.mxu0
    %748 = vmatpush.bf16.msra.mxu0 %v718
    %749 = vmatpush.bf16.msra.mxu0 %v716
    %750 = vmatpush.bf16.msra.mxu0 %v714
    %751 = vmatpush.bf16.msra.mxu0 %v712
    %752 = vmatpush.bf16.msra.mxu0 %v710
    %753 = vmatpush.bf16.msra.mxu0 %v708
    %754 = vmatpush.bf16.msra.mxu0 %v706
    %755 = vmatpush.bf16.msra.mxu0 %v704
    %756 = vmatmul.bf16.gmra.mxu0 %v632
    %v757 = vpop.f32.mrf.mxu0
    %v758 = vadd.f32 %v652, %v757
    %v759 = vpop.f32.mrf.mxu0
    %760 = vdwg.mxu0
    %v761 = vmul.f32 %v745, %v745
    %v762 = vmul.f32 %v758, %v758
    %v763 = vmul.f32 %v745, %v761
    %v764 = vmul.f32 %v758, %v762
    %v765 = vmul.f32 %v763, 0.044715
    %v766 = vmul.f32 %v764, 0.044715
    %v767 = vadd.f32 %v745, %v765
    %v768 = vadd.f32 %v758, %v766
    %v769 = vmul.f32 %v767, 0.7978846
    %v770 = vmul.f32 %v768, 0.7978846
    %v771 = vtanh.pop %v769
    %v772 = vtanh.pop %v770
    %v773 = vadd.f32 %v771, 1.0
    %v774 = vadd.f32 %v772, 1.0
    %v775 = vmul.f32 %v773, 0.5
    %v776 = vmul.f32 %v774, 0.5
    %v777 = vmul.f32 %v745, %v775
    %v778 = vmul.f32 %v758, %v776
    %v779 = vpack.c.bf16 %v777, %v777
    %v780 = vpack.c.bf16 %v778, %v778
    %v781 = vld [vmem:[#allocation15] sm:$0xf]
    %v782 = vld [vmem:[#allocation15 + $0x4] sm:$0xf]
    %v783 = vld [vmem:[#allocation15 + $0x8] sm:$0xf]
    %v784 = vld [vmem:[#allocation15 + $0xc] sm:$0xf]
    %v785 = vld [vmem:[#allocation15 + $0x10] sm:$0xf]
    %v786 = vld [vmem:[#allocation15 + $0x14] sm:$0xf]
    %v787 = vld [vmem:[#allocation15 + $0x18] sm:$0xf]
    %v788 = vld [vmem:[#allocation15 + $0x1c] sm:$0xf]
    %v789 = vld [vmem:[#allocation15 + $0x20] sm:$0xf]
    %v790 = vld [vmem:[#allocation15 + $0x24] sm:$0xf]
    %v791 = vld [vmem:[#allocation15 + $0x28] sm:$0xf]
    %v792 = vld [vmem:[#allocation15 + $0x2c] sm:$0xf]
    %v793 = vld [vmem:[#allocation15 + $0x30] sm:$0xf]
    %v794 = vld [vmem:[#allocation15 + $0x34] sm:$0xf]
    %v795 = vld [vmem:[#allocation15 + $0x38] sm:$0xf]
    %v796 = vld [vmem:[#allocation15 + $0x3c] sm:$0xf]
    %v797 = vld [vmem:[#allocation15 + $0x40] sm:$0xf]
    %v798 = vld [vmem:[#allocation15 + $0x44] sm:$0xf]
    %v799 = vld [vmem:[#allocation15 + $0x48] sm:$0xf]
    %v800 = vld [vmem:[#allocation15 + $0x4c] sm:$0xf]
    %v801 = vld [vmem:[#allocation15 + $0x50] sm:$0xf]
    %v802 = vld [vmem:[#allocation15 + $0x54] sm:$0xf]
    %v803 = vld [vmem:[#allocation15 + $0x58] sm:$0xf]
    %v804 = vld [vmem:[#allocation15 + $0x5c] sm:$0xf]
    %v805 = vld [vmem:[#allocation15 + $0x60] sm:$0xf]
    %v806 = vld [vmem:[#allocation15 + $0x64] sm:$0xf]
    %v807 = vld [vmem:[#allocation15 + $0x68] sm:$0xf]
    %v808 = vld [vmem:[#allocation15 + $0x6c] sm:$0xf]
    %v809 = vld [vmem:[#allocation15 + $0x70] sm:$0xf]
    %v810 = vld [vmem:[#allocation15 + $0x74] sm:$0xf]
    %v811 = vld [vmem:[#allocation15 + $0x78] sm:$0xf]
    %v812 = vld [vmem:[#allocation15 + $0x7c] sm:$0xf]
    %v813 = vld [vmem:[%s16] sm:$0x1]
    %v815 = vperm.slane %v813, 0
    %v849 = vunpack.c.l.b16 %v781
    %v850 = vunpack.c.l.b16 %v782
    %v851 = vunpack.c.l.b16 %v783
    %v852 = vunpack.c.l.b16 %v784
    %v853 = vunpack.c.l.b16 %v785
    %v854 = vunpack.c.l.b16 %v786
    %v855 = vunpack.c.l.b16 %v787
    %v856 = vunpack.c.l.b16 %v788
    %v857 = vunpack.c.l.b16 %v789
    %v858 = vunpack.c.l.b16 %v790
    %v859 = vunpack.c.l.b16 %v791
    %v860 = vunpack.c.l.b16 %v792
    %v861 = vunpack.c.l.b16 %v793
    %v862 = vunpack.c.l.b16 %v794
    %v863 = vunpack.c.l.b16 %v795
    %v864 = vunpack.c.l.b16 %v796
    %v865 = vunpack.c.l.b16 %v797
    %v866 = vunpack.c.l.b16 %v798
    %v867 = vunpack.c.l.b16 %v799
    %v868 = vunpack.c.l.b16 %v800
    %v869 = vunpack.c.l.b16 %v801
    %v870 = vunpack.c.l.b16 %v802
    %v871 = vunpack.c.l.b16 %v803
    %v872 = vunpack.c.l.b16 %v804
    %v873 = vunpack.c.l.b16 %v805
    %v874 = vunpack.c.l.b16 %v806
    %v875 = vunpack.c.l.b16 %v807
    %v876 = vunpack.c.l.b16 %v808
    %v877 = vunpack.c.l.b16 %v809
    %v878 = vunpack.c.l.b16 %v810
    %v879 = vunpack.c.l.b16 %v811
    %v880 = vunpack.c.l.b16 %v812
    %v881 = vpack.c.b16 %v850, %v849
    %v882 = vpack.c.b16 %v852, %v851
    %v883 = vpack.c.b16 %v854, %v853
    %v884 = vpack.c.b16 %v856, %v855
    %v885 = vpack.c.b16 %v858, %v857
    %v886 = vpack.c.b16 %v860, %v859
    %v887 = vpack.c.b16 %v862, %v861
    %v888 = vpack.c.b16 %v864, %v863
    %v889 = vpack.c.b16 %v866, %v865
    %v890 = vpack.c.b16 %v868, %v867
    %v891 = vpack.c.b16 %v870, %v869
    %v892 = vpack.c.b16 %v872, %v871
    %v893 = vpack.c.b16 %v874, %v873
    %v894 = vpack.c.b16 %v876, %v875
    %v895 = vpack.c.b16 %v878, %v877
    %v896 = vpack.c.b16 %v880, %v879
    %913 = vmatpush.bf16.msra.mxu0 %v888
    %914 = vmatpush.bf16.msra.mxu0 %v887
    %915 = vmatpush.bf16.msra.mxu0 %v886
    %916 = vmatpush.bf16.msra.mxu0 %v885
    %917 = vmatpush.bf16.msra.mxu0 %v884
    %918 = vmatpush.bf16.msra.mxu0 %v883
    %919 = vmatpush.bf16.msra.mxu0 %v882
    %920 = vmatpush.bf16.msra.mxu0 %v881
    %921 = vmatmul.bf16.gmra.mxu0 %v779
    %v922 = vpop.f32.mrf.mxu0
    %v923 = vadd.f32 %v815, %v922
    %v924 = vpop.f32.mrf.mxu0
    %925 = vdwg.mxu0
    %926 = vmatpush.bf16.msra.mxu0 %v896
    %927 = vmatpush.bf16.msra.mxu0 %v895
    %928 = vmatpush.bf16.msra.mxu0 %v894
    %929 = vmatpush.bf16.msra.mxu0 %v893
    %930 = vmatpush.bf16.msra.mxu0 %v892
    %931 = vmatpush.bf16.msra.mxu0 %v891
    %932 = vmatpush.bf16.msra.mxu0 %v890
    %933 = vmatpush.bf16.msra.mxu0 %v889
    %934 = vmatmul.bf16.gmra.mxu0 %v780
    %v935 = vpop.f32.mrf.mxu0
    %v936 = vadd.f32 %v923, %v935
    %v937 = vpop.f32.mrf.mxu0
    %938 = vdwg.mxu0
    %v939 = vadd.f32 %v631, %v936
    %v940 = vld [vmem:[%s17] sm:$0x1]
    %v941 = vld [vmem:[%s18] sm:$0x1]
    %v942 = vsel %vm594, %v939, 0.0
    %943 = vadd.xlane.f32.xlu0 %v942
    %v944 = vpop.xlane.xlu0 %943
    %v945 = vmul.f32 %v944, %v604
    %v946 = vsub.f32 %v939, %v945
    %v947 = vmul.f32 %v946, %v946
    %v948 = vsel %vm594, %v947, 0.0
    %949 = vadd.xlane.f32.xlu0 %v948
    %v950 = vpop.xlane.xlu0 %949
    %v951 = vmul.f32 %v950, %v604
    %v952 = vadd.f32 %v951, 1e-05
    %v953 = vrsqrt.pop %v952
    %v954 = vmul.f32 %v953, %v952
    %v955 = vmul.f32 %v954, %v953
    %v956 = vmul.f32 0.5, %v955
    %v957 = vsub.f32 1.5, %v956
    %v958 = vmul.f32 %v953, %v957
    %vm959 = vweird.f32 %v952
    %vm960 = vweird.f32 %v953
    %vm961 = vmor %vm959, %vm960
    %v962 = vsel %vm961, %v953, %v958
    %v963 = vmul.f32 %v946, %v962
    %v965 = vperm.slane %v940, 0
    %v967 = vmul.f32 %v963, %v965
    %v969 = vperm.slane %v941, 0
    %v971 = vadd.f32 %v967, %v969
    %v972 = vld [vmem:[%s19] sm:$0x3]
    %v973 = vmul.f32 %v971, %v972
    %v974 = vsel %vm594, %v973, 0.0
    %975 = vadd.xlane.f32.xlu0 %v974
    %v976 = vpop.xlane.xlu0 %975
    %v977 = vld [vmem:[%s20] sm:$0x3]
    %v978 = vadd.f32 %v976, %v977
    %vm979 = vcmask 1024
    %980 = vst.msk [vmem:[%s21] sm:$0x3] %vm979, %v978
    // Predicated region
    $region122: #{tpu_custom_call.1} parent=1 // pred_check
      _
    $region123: #{tpu_custom_call.1} parent=1 // pred_check_branch
      %982 = sbr.rel (0) target = $region125
    $region124: #{tpu_custom_call.1} parent=1 // pred_region
      _
    $region125: #{tpu_custom_call.1} parent=1 // pred_fallthru
      _
    // Predicated region
    $region126: #{tpu_custom_call.1} parent=1 // pred_check
      _
    $region127: #{tpu_custom_call.1} parent=1 // pred_check_branch
      %984 = sbr.rel (0) target = $region129
    $region128: #{tpu_custom_call.1} parent=1 // pred_region
      _
    $region129: #{tpu_custom_call.1} parent=1 // pred_fallthru
      _
    %985 = vsyncpa [#allocation3], 1
    %986 = vsyncpa [#allocation5], 1
    %987 = vsyncpa [#allocation8], 1
    %988 = vsyncpa [#allocation11], 1
    %989 = vsyncpa [#allocation14], 1

</llo_original>
